<compile_context>
chip_gen: v6e
topology: v6e:2x2x1
jax: 0.10.0
libtpu: 0.0.40
codegen_flags: <defaults>
</compile_context>

<pallas_src>
import jax
import jax.numpy as jnp
from jax.experimental import pallas as pl
from jax.experimental.pallas import tpu as pltpu


# --------------------------------------------------------------- utilities ---
def _rup(v, a):
    return ((v + a - 1) // a) * a


def _mxu_cost(m, k, n):
    """Padded MXU work: sublane-pad rows to 8, contraction/output lanes to 128."""
    return _rup(m, 8) * _rup(k, 128) * _rup(n, 128)


def _agg_linear_tanh(A, X, W, b):
    """tanh(A @ X @ W + b); association chosen from padded MXU cost (static)."""
    M, N = A.shape
    K = X.shape[1]
    H = W.shape[1]
    left = _mxu_cost(M, N, K) + _mxu_cost(M, K, H)     # (A @ X) @ W
    right = _mxu_cost(N, K, H) + _mxu_cost(M, N, H)    # A @ (X @ W)
    if left <= right:
        h = jnp.dot(jnp.dot(A, X, preferred_element_type=jnp.float32), W,
                    preferred_element_type=jnp.float32)
    else:
        h = jnp.dot(A, jnp.dot(X, W, preferred_element_type=jnp.float32),
                    preferred_element_type=jnp.float32)
    return jnp.tanh(h + b)


def _pack_rows(pieces, width):
    """Stack 2-D pieces into one f32 slab along rows at 8-aligned offsets,
    zero-padding rows and columns.  Returns (slab, row_offsets).  Setup path."""
    offs, total = [], 0
    for p in pieces:
        offs.append(total)
        total += _rup(p.shape[0], 8)
    slab = jnp.zeros((max(total, 8), width), jnp.float32)
    for off, p in zip(offs, pieces):
        p = jnp.asarray(p, jnp.float32)
        slab = slab.at[off:off + p.shape[0], :p.shape[1]].set(p)
    return slab, offs


# ------------------------------------------------------------------ kernel ---
def _make_kernel(m):
    """m: dict of static Python ints (sizes + slab row offsets)."""

    def kernel(s_ref, w_ref, d_ref, o_ref):
        f32 = jnp.float32

        # ---- static slab views (offsets are Python ints, 8-row aligned) ----
        A1 = s_ref[m["so_A1"]:m["so_A1"] + m["N1p"], 0:m["N1p"]]
        P1 = s_ref[m["so_P1"]:m["so_P1"] + m["G1"], 0:m["N1p"]]
        Cs = s_ref[m["so_C"]:m["so_C"] + m["G1"] * m["N2p"], 0:m["N2p"]]
        P2 = s_ref[m["so_P2"]:m["so_P2"] + m["G2p"], 0:m["N2p"]]

        W1c = w_ref[m["wo_W1c"]:m["wo_W1c"] + m["in_f"], 0:m["hid_f"]]
        b1c = w_ref[m["wo_b1c"]:m["wo_b1c"] + 1, 0:m["hid_f"]]
        W1l = w_ref[m["wo_W1l"]:m["wo_W1l"] + m["hid_f"], 0:m["in_f"]]
        b1l = w_ref[m["wo_b1l"]:m["wo_b1l"] + 1, 0:m["in_f"]]
        W2c = w_ref[m["wo_W2c"]:m["wo_W2c"] + m["in_f"], 0:m["hid_f"]]
        b2c = w_ref[m["wo_b2c"]:m["wo_b2c"] + 1, 0:m["hid_f"]]
        # Final linear: columns zero-padded to OUTL at pack time -> lane-dense out.
        W2l = w_ref[m["wo_W2l"]:m["wo_W2l"] + m["hid_f"], 0:m["OUTL"]]
        b2l = w_ref[m["wo_b2l"]:m["wo_b2l"] + 1, 0:m["OUTL"]]

        X1 = d_ref[0:m["N1p"], 0:m["in_f"]]
        X2 = d_ref[m["N1p"]:m["N1p"] + m["N2p"], 0:m["in_f"]]

        # ---- stage 1: GCNConv + tanh, then global_mean_pool + Linear + tanh ----
        node1 = _agg_linear_tanh(A1, X1, W1c, b1c)          # (N1p, hid_f)
        graph1 = _agg_linear_tanh(P1, node1, W1l, b1l)       # (G1,  in_f)

        # ---- edge features + message aggregation (all in VMEM/vregs) ----
        # TODO(synk): gnnrl.graph_env.graph_construction.create_edge_features and
        # the custom `gcn` edge layer source are unavailable; approximated (same as
        # before) as msg_e = x2[src_e] * graph1[type_e], agg_i = sum_{dst_e=i} msg_e,
        # computed WITHOUT per-edge selection matmuls via
        #   agg = sum_t (C_t @ x2) * graph1[t]   (C_t densified once at setup).
        CX = jnp.dot(Cs, X2, preferred_element_type=f32)     # (G1*N2p, in_f)
        agg = jnp.zeros((m["N2p"], m["in_f"]), f32)
        for t in range(m["G1"]):                             # static unroll, G1 tiny
            agg = agg + CX[t * m["N2p"]:(t + 1) * m["N2p"], :] * graph1[t:t + 1, :]

        # ---- stage 2: edge conv + tanh (dropout = identity in eval),
        #               then global_mean_pool + Linear + tanh ----
        node2 = jnp.tanh(jnp.dot(agg, W2c, preferred_element_type=f32) + b2c)
        o_ref[...] = _agg_linear_tanh(P2, node2, W2l, b2l)   # (G2p, OUTL) lane-dense

    return kernel


def fused_multi_stage(struct, wb, data_slab):
    """Entire forward of one hierarchical graph in ONE Pallas call.
    Inputs: 3 packed f32 slabs (structure, weights+biases, node features)."""
    meta = dict(struct["dims"])
    meta.update(wb["dims"])
    out = pl.pallas_call(
        _make_kernel(meta),
        out_shape=jax.ShapeDtypeStruct((meta["G2p"], meta["OUTL"]), jnp.float32),
        in_specs=[pl.BlockSpec(memory_space=pltpu.MemorySpace.VMEM)] * 3,
        out_specs=pl.BlockSpec(memory_space=pltpu.MemorySpace.VMEM),
    )(struct["slab"], wb["slab"], data_slab)
    # strip lane/sublane padding added for a dense (8,128) store
    return out[:meta["G2"], :meta["out_f"]]


# ---------------------------------------------- setup (NOT the hot path) ------
def mean_pool_matrix(batch, num_graphs):
    """Dense global_mean_pool matrix (num_graphs x num_nodes)."""
    onehot = (batch[None, :] == jnp.arange(num_graphs)[:, None]).astype(jnp.float32)
    counts = onehot.sum(axis=1, keepdims=True)
    # NOTE: empty graphs pool to zero (PyG would NaN on degenerate batches).
    return onehot / jnp.maximum(counts, 1.0)


def build_graph_structure(level1, level2):
    """Densify static graph topology into matmul operators and pack them into
    ONE f32 slab.  Called once per topology (setup, not per-forward)."""
    x1, ei1 = level1["x"], level1["edge_index"]
    batch1, G1 = level1["batch"], int(level1["num_graphs"])
    x2, ei2, et2 = level2["x"], level2["edge_index"], level2["edge_type"]
    batch2, G2 = level2["batch"], int(level2["num_graphs"])

    N1, N2 = x1.shape[0], x2.shape[0]
    N1p, N2p, G2p = _rup(N1, 8), _rup(N2, 8), _rup(G2, 8)

    # PyG GCNConv normalization D^{-1/2}(A+I)D^{-1/2}; duplicate edges accumulate.
    src1, dst1 = ei1[0], ei1[1]
    A = jnp.zeros((N1, N1), jnp.float32).at[dst1, src1].add(1.0)
    A = A + jnp.eye(N1, dtype=jnp.float32)
    deg = A.sum(axis=1)
    dinv = jnp.where(deg > 0, 1.0 / jnp.sqrt(deg), 0.0)
    A1 = dinv[:, None] * A * dinv[None, :]                       # (N1, N1)

    P1 = mean_pool_matrix(batch1, G1)                            # (G1, N1)
    P2 = mean_pool_matrix(batch2, G2)                            # (G2, N2)

    # Per-edge-type scatter operator: C[t, i, j] = #edges (j -> i) with type t.
    src2, dst2 = ei2[0], ei2[1]
    C = jnp.zeros((G1, N2, N2), jnp.float32).at[et2, dst2, src2].add(1.0)
    Cstk = jnp.zeros((G1, N2p, N2p), jnp.float32).at[:, :N2, :N2].set(C)
    Cstk = Cstk.reshape(G1 * N2p, N2p)

    width = _rup(max(N1p, N2p), 128)
    slab, (so_A1, so_P1, so_C, so_P2) = _pack_rows([A1, P1, Cstk, P2], width)

    dims = dict(N1=N1, N1p=N1p, N2=N2, N2p=N2p, G1=G1, G2=G2, G2p=G2p,
                so_A1=so_A1, so_P1=so_P1, so_C=so_C, so_P2=so_P2)
    return dict(slab=slab, dims=dims)


def pack_params(params, in_f, hid_f, out_f):
    """Pack all weights & biases into ONE f32 slab (setup, once).  The final
    Linear's weight/bias columns are zero-padded to 128 lanes so the kernel's
    output store is lane-dense."""
    s1, s2 = params["stage1"], params["stage2"]
    OUTL = _rup(out_f, 128)
    width = _rup(max(in_f, hid_f, OUTL), 128)
    pieces = [s1["conv_w"], s1["conv_b"].reshape(1, -1),
              s1["lin_w"], s1["lin_b"].reshape(1, -1),
              s2["conv_w"], s2["conv_b"].reshape(1, -1),
              s2["lin_w"], s2["lin_b"].reshape(1, -1)]
    slab, offs = _pack_rows(pieces, width)
    dims = dict(in_f=in_f, hid_f=hid_f, out_f=out_f, OUTL=OUTL,
                wo_W1c=offs[0], wo_b1c=offs[1], wo_W1l=offs[2], wo_b1l=offs[3],
                wo_W2c=offs[4], wo_b2c=offs[5], wo_W2l=offs[6], wo_b2l=offs[7])
    return dict(slab=slab, dims=dims)


def pack_node_features(x1, x2, in_f):
    """Pack per-forward node features into one lane-aligned f32 slab."""
    slab, _ = _pack_rows([x1, x2], _rup(in_f, 128))
    return slab


# ----------------------------------------------------------------- forward ---
def multi_stage_forward(wb, hierarchical_graphs, structures=None):
    """Matches multi_stage_graph_encoder.forward: the torch reference returns
    ONLY the i == 0 hierarchical embedding (its torch.cat result is dropped),
    so the dead work for i > 0 is skipped entirely."""
    if not isinstance(hierarchical_graphs, list):
        hierarchical_graphs = [hierarchical_graphs]
    hg = hierarchical_graphs[0]
    struct = (structures[0] if structures is not None
              else build_graph_structure(hg["level1"], hg["level2"]))
    data_slab = pack_node_features(hg["level1"]["x"], hg["level2"]["x"],
                                   wb["dims"]["in_f"])
    return fused_multi_stage(struct, wb, data_slab)


# ------------------------------------------------------------------ params ---
def init_params(key, in_f, hid_f, out_f):
    ks = jax.random.split(key, 6)

    def glorot(k, shape):
        lim = jnp.sqrt(6.0 / (shape[0] + shape[1]))
        return jax.random.uniform(k, shape, jnp.float32, -lim, lim)

    stage1 = dict(   # GCNConv(in_f, hid_f) + Linear(hid_f, in_f)
        conv_w=glorot(ks[0], (in_f, hid_f)),
        conv_b=jnp.zeros((hid_f,), jnp.float32),
        lin_w=glorot(ks[1], (hid_f, in_f)),
        lin_b=jax.random.uniform(ks[2], (in_f,), jnp.float32, -0.1, 0.1),
    )
    stage2 = dict(   # gcn(in_f, hid_f) + Linear(hid_f, out_f)
        conv_w=glorot(ks[3], (in_f, hid_f)),
        conv_b=jnp.zeros((hid_f,), jnp.float32),
        lin_w=glorot(ks[4], (hid_f, out_f)),
        lin_b=jax.random.uniform(ks[5], (out_f,), jnp.float32, -0.1, 0.1),
    )
    return dict(stage1=stage1, stage2=stage2)


# -------------------------------------------------------------------- main ---
if __name__ == "__main__":
    key = jax.random.PRNGKey(0)
    in_f, hid_f, out_f = 8, 16, 8
    params = init_params(key, in_f, hid_f, out_f)

    # Level-1: 3 subgraphs of 4 nodes each (12 nodes), undirected chain edges.
    kx1, kx2 = jax.random.split(jax.random.fold_in(key, 1))
    x1 = jax.random.normal(kx1, (12, in_f), jnp.float32)
    src1, dst1 = [], []
    for g in range(3):
        base = 4 * g
        for a, b in [(0, 1), (1, 2), (2, 3)]:
            src1 += [base + a, base + b]
            dst1 += [base + b, base + a]
    edge_index1 = jnp.array([src1, dst1], dtype=jnp.int32)          # (2, 18)
    batch1 = jnp.repeat(jnp.arange(3, dtype=jnp.int32), 4)          # (12,)

    # Level-2: 3 nodes (one per level-1 subgraph), fully connected directed edges.
    x2 = jax.random.normal(kx2, (3, in_f), jnp.float32)
    pairs = [(i, j) for i in range(3) for j in range(3) if i != j]
    edge_index2 = jnp.array([[a for a, _ in pairs],
                             [b for _, b in pairs]], dtype=jnp.int32)  # (2, 6)
    edge_type2 = jnp.array([a for a, _ in pairs], dtype=jnp.int32)     # (6,)
    batch2 = jnp.zeros((3,), jnp.int32)

    hg = {
        "level1": dict(x=x1, edge_index=edge_index1, batch=batch1, num_graphs=3),
        "level2": dict(x=x2, edge_index=edge_index2, edge_type=edge_type2,
                       batch=batch2, num_graphs=1),
    }

    # Setup (once per params / topology): pack weights and densified structure
    # into contiguous slabs; the per-forward path is a single fused Pallas call.
    wb = pack_params(params, in_f, hid_f, out_f)
    structures = [build_graph_structure(hg["level1"], hg["level2"])]

    out = multi_stage_forward(wb, [hg], structures)
    out = jax.block_until_ready(out)
    assert out.shape == (1, out_f), out.shape
    assert bool(jnp.all(jnp.isfinite(out)))
    print("KERNEL_OK")
</pallas_src>

<mosaic_0001>
module attributes {stable_mosaic.version = 11 : i64} {
  func.func @kernel(%arg0: memref<56x128xf32, #tpu.memory_space<vmem>>, %arg1: memref<80x128xf32, #tpu.memory_space<vmem>>, %arg2: memref<24x128xf32, #tpu.memory_space<vmem>>, %arg3: memref<8x128xf32, #tpu.memory_space<vmem>>) attributes {dimension_semantics = [], scalar_prefetch = 0 : i64, scratch_operands = 0 : i64, tpu.core_type = #tpu.core_type<tc>} {
    %c0 = arith.constant 0 : index
    %c0_0 = arith.constant 0 : index
    %0 = vector.load %arg0[%c0, %c0_0] : memref<56x128xf32, #tpu.memory_space<vmem>>, vector<16x16xf32>
    %c16 = arith.constant 16 : index
    %c0_1 = arith.constant 0 : index
    %1 = vector.load %arg0[%c16, %c0_1] : memref<56x128xf32, #tpu.memory_space<vmem>>, vector<3x16xf32>
    %c24 = arith.constant 24 : index
    %c0_2 = arith.constant 0 : index
    %2 = vector.load %arg0[%c24, %c0_2] : memref<56x128xf32, #tpu.memory_space<vmem>>, vector<24x8xf32>
    %c48 = arith.constant 48 : index
    %c0_3 = arith.constant 0 : index
    %3 = vector.load %arg0[%c48, %c0_3] : memref<56x128xf32, #tpu.memory_space<vmem>>, vector<8x8xf32>
    %c0_4 = arith.constant 0 : index
    %c0_5 = arith.constant 0 : index
    %4 = vector.load %arg1[%c0_4, %c0_5] : memref<80x128xf32, #tpu.memory_space<vmem>>, vector<8x16xf32>
    %c8 = arith.constant 8 : index
    %c0_6 = arith.constant 0 : index
    %5 = vector.load %arg1[%c8, %c0_6] : memref<80x128xf32, #tpu.memory_space<vmem>>, vector<1x16xf32>
    %c16_7 = arith.constant 16 : index
    %c0_8 = arith.constant 0 : index
    %6 = vector.load %arg1[%c16_7, %c0_8] : memref<80x128xf32, #tpu.memory_space<vmem>>, vector<16x8xf32>
    %c32 = arith.constant 32 : index
    %c0_9 = arith.constant 0 : index
    %7 = vector.load %arg1[%c32, %c0_9] : memref<80x128xf32, #tpu.memory_space<vmem>>, vector<1x8xf32>
    %c40 = arith.constant 40 : index
    %c0_10 = arith.constant 0 : index
    %8 = vector.load %arg1[%c40, %c0_10] : memref<80x128xf32, #tpu.memory_space<vmem>>, vector<8x16xf32>
    %c48_11 = arith.constant 48 : index
    %c0_12 = arith.constant 0 : index
    %9 = vector.load %arg1[%c48_11, %c0_12] : memref<80x128xf32, #tpu.memory_space<vmem>>, vector<1x16xf32>
    %c56 = arith.constant 56 : index
    %c0_13 = arith.constant 0 : index
    %10 = vector.load %arg1[%c56, %c0_13] : memref<80x128xf32, #tpu.memory_space<vmem>>, vector<16x128xf32>
    %c72 = arith.constant 72 : index
    %c0_14 = arith.constant 0 : index
    %11 = vector.load %arg1[%c72, %c0_14] : memref<80x128xf32, #tpu.memory_space<vmem>>, vector<1x128xf32>
    %c0_15 = arith.constant 0 : index
    %c0_16 = arith.constant 0 : index
    %12 = vector.load %arg2[%c0_15, %c0_16] : memref<24x128xf32, #tpu.memory_space<vmem>>, vector<16x8xf32>
    %c16_17 = arith.constant 16 : index
    %c0_18 = arith.constant 0 : index
    %13 = vector.load %arg2[%c16_17, %c0_18] : memref<24x128xf32, #tpu.memory_space<vmem>>, vector<8x8xf32>
    %cst = arith.constant dense<0.000000e+00> : vector<16x8xf32>
    %14 = tpu.matmul %0, %12, %cst {dimension_numbers = #tpu.dot_dimension_numbers<[1], [0], [0], [1], [0, 0, 1, 1], [], []>} : vector<16x16xf32>, vector<16x8xf32>, vector<16x8xf32> -> vector<16x8xf32>
    %cst_19 = arith.constant dense<0.000000e+00> : vector<16x16xf32>
    %15 = tpu.matmul %14, %4, %cst_19 {dimension_numbers = #tpu.dot_dimension_numbers<[1], [0], [0], [1], [0, 0, 1, 1], [], []>} : vector<16x8xf32>, vector<8x16xf32>, vector<16x16xf32> -> vector<16x16xf32>
    %16 = vector.broadcast %5 : vector<1x16xf32> to vector<16x16xf32>
    %17 = arith.addf %15, %16 : vector<16x16xf32>
    %18 = math.tanh %17 : vector<16x16xf32>
    %cst_20 = arith.constant dense<0.000000e+00> : vector<3x16xf32>
    %19 = tpu.matmul %1, %18, %cst_20 {dimension_numbers = #tpu.dot_dimension_numbers<[1], [0], [0], [1], [0, 0, 1, 1], [], []>} : vector<3x16xf32>, vector<16x16xf32>, vector<3x16xf32> -> vector<3x16xf32>
    %cst_21 = arith.constant dense<0.000000e+00> : vector<3x8xf32>
    %20 = tpu.matmul %19, %6, %cst_21 {dimension_numbers = #tpu.dot_dimension_numbers<[1], [0], [0], [1], [0, 0, 1, 1], [], []>} : vector<3x16xf32>, vector<16x8xf32>, vector<3x8xf32> -> vector<3x8xf32>
    %21 = vector.broadcast %7 : vector<1x8xf32> to vector<3x8xf32>
    %22 = arith.addf %20, %21 : vector<3x8xf32>
    %23 = math.tanh %22 : vector<3x8xf32>
    %cst_22 = arith.constant dense<0.000000e+00> : vector<24x8xf32>
    %24 = tpu.matmul %2, %13, %cst_22 {dimension_numbers = #tpu.dot_dimension_numbers<[1], [0], [0], [1], [0, 0, 1, 1], [], []>} : vector<24x8xf32>, vector<8x8xf32>, vector<24x8xf32> -> vector<24x8xf32>
    %cst_23 = arith.constant 0.000000e+00 : f32
    %25 = vector.broadcast %cst_23 : f32 to vector<8x8xf32>
    %26 = vector.extract_strided_slice %24 {offsets = [0, 0], sizes = [8, 8], strides = [1, 1]} : vector<24x8xf32> to vector<8x8xf32>
    %27 = vector.extract_strided_slice %23 {offsets = [0, 0], sizes = [1, 8], strides = [1, 1]} : vector<3x8xf32> to vector<1x8xf32>
    %28 = vector.broadcast %27 : vector<1x8xf32> to vector<8x8xf32>
    %29 = arith.mulf %26, %28 : vector<8x8xf32>
    %30 = arith.addf %25, %29 : vector<8x8xf32>
    %31 = vector.extract_strided_slice %24 {offsets = [8, 0], sizes = [8, 8], strides = [1, 1]} : vector<24x8xf32> to vector<8x8xf32>
    %32 = vector.extract_strided_slice %23 {offsets = [1, 0], sizes = [1, 8], strides = [1, 1]} : vector<3x8xf32> to vector<1x8xf32>
    %33 = vector.broadcast %32 : vector<1x8xf32> to vector<8x8xf32>
    %34 = arith.mulf %31, %33 : vector<8x8xf32>
    %35 = arith.addf %30, %34 : vector<8x8xf32>
    %36 = vector.extract_strided_slice %24 {offsets = [16, 0], sizes = [8, 8], strides = [1, 1]} : vector<24x8xf32> to vector<8x8xf32>
    %37 = vector.extract_strided_slice %23 {offsets = [2, 0], sizes = [1, 8], strides = [1, 1]} : vector<3x8xf32> to vector<1x8xf32>
    %38 = vector.broadcast %37 : vector<1x8xf32> to vector<8x8xf32>
    %39 = arith.mulf %36, %38 : vector<8x8xf32>
    %40 = arith.addf %35, %39 : vector<8x8xf32>
    %cst_24 = arith.constant dense<0.000000e+00> : vector<8x16xf32>
    %41 = tpu.matmul %40, %8, %cst_24 {dimension_numbers = #tpu.dot_dimension_numbers<[1], [0], [0], [1], [0, 0, 1, 1], [], []>} : vector<8x8xf32>, vector<8x16xf32>, vector<8x16xf32> -> vector<8x16xf32>
    %42 = vector.broadcast %9 : vector<1x16xf32> to vector<8x16xf32>
    %43 = arith.addf %41, %42 : vector<8x16xf32>
    %44 = math.tanh %43 : vector<8x16xf32>
    %cst_25 = arith.constant dense<0.000000e+00> : vector<8x16xf32>
    %45 = tpu.matmul %3, %44, %cst_25 {dimension_numbers = #tpu.dot_dimension_numbers<[1], [0], [0], [1], [0, 0, 1, 1], [], []>} : vector<8x8xf32>, vector<8x16xf32>, vector<8x16xf32> -> vector<8x16xf32>
    %cst_26 = arith.constant dense<0.000000e+00> : vector<8x128xf32>
    %46 = tpu.matmul %45, %10, %cst_26 {dimension_numbers = #tpu.dot_dimension_numbers<[1], [0], [0], [1], [0, 0, 1, 1], [], []>} : vector<8x16xf32>, vector<16x128xf32>, vector<8x128xf32> -> vector<8x128xf32>
    %47 = vector.broadcast %11 : vector<1x128xf32> to vector<8x128xf32>
    %48 = arith.addf %46, %47 : vector<8x128xf32>
    %49 = math.tanh %48 : vector<8x128xf32>
    %c0_27 = arith.constant 0 : index
    %c0_28 = arith.constant 0 : index
    %50 = vector.load %arg3[%c0_27, %c0_28] : memref<8x128xf32, #tpu.memory_space<vmem>>, vector<8x128xf32>
    tpu.vector_store %arg3[%c0_27, %c0_28], %49 {strides = array<i32>} : memref<8x128xf32, #tpu.memory_space<vmem>>, vector<8x128xf32>,
    return
  }
}

</mosaic_0001>

<llo_original>
// kernel: tpu_custom_call.1
$region0: #{tpu_custom_call.1}
  #allocation0 [shape = 'u32[]', space=smem, size = 0x4, offset = 0x4, fixed_abs, tag = 'smem constant byte address 0x4 - core index']
  #allocation1 [shape = 'u32[144,128]{1,0:T(1,128)}', space=vmem, size = 0x12000, scoped, tag = 'internal scratch']
  %s0 = inlined_call_operand.hbm [shape: f32[56,128], index: 0, kind: input, shape index: {}]
  %s1 = inlined_call_operand.hbm [shape: f32[80,128], index: 1, kind: input, shape index: {}]
  %s2 = inlined_call_operand.hbm [shape: f32[24,128], index: 2, kind: input, shape index: {}]
  %s3 = inlined_call_operand.hbm [shape: f32[8,128], index: 3, kind: output, shape index: {}]
  %s4 = sld [smem:[#allocation0]]
  $region34: #{tpu_custom_call.1} parent=0
    _
  %s6 = ssub.s32 1, %s4
  %s7 = scalar_select 0, %s6, %s4
  $region1: #{tpu_custom_call.1} parent=0
    #allocation2 [shape = 'u8[28672]{0}', space=vmem, size = 0x7000, scoped, tag = 'input window, operand 0, single buffered']
    #allocation3 [shape = 's32[1]{0}', space=sflag, size = 0x4, scoped, tag = 'scoped memory for tpu_custom_call.1']
    #allocation4 [shape = 's32[1]{0}', space=sflag, size = 0x4, scoped, tag = 'scoped memory for tpu_custom_call.1']
    #allocation5 [shape = 'u8[40960]{0}', space=vmem, size = 0xa000, scoped, tag = 'input window, operand 1, single buffered']
    #allocation6 [shape = 's32[1]{0}', space=sflag, size = 0x4, scoped, tag = 'scoped memory for tpu_custom_call.1']
    #allocation7 [shape = 'u8[12288]{0}', space=vmem, size = 0x3000, scoped, tag = 'input window, operand 2, single buffered']
    #allocation8 [shape = 'u8[4096]{0}', space=vmem, size = 0x1000, scoped, tag = 'output window, operand 0, single buffered']
    %8 = vsyncpa [#allocation3], 0
    %9 = vsyncpa [#allocation6], 0
    %10 = vsyncpa [#allocation4], 0
    // Predicated region
    $region2: #{tpu_custom_call.1} parent=1 // pred_check
      _
    $region3: #{tpu_custom_call.1} parent=1 // pred_check_branch
      %12 = sbr.rel (0) target = $region5
    $region4: #{tpu_custom_call.1} parent=1 // pred_region
      %s14 = ssub.s32 896, 896
      %15 = vsyncadd [#allocation3], %s14
      %s16 = sshll.u32 [#allocation2], 4
      %s17 = int_to_ptr.vmem [resolvable:$true] %s16
      %22 = dma.hbm_to_vmem [thread:$0]  %s0, 896, %s17, [#allocation3], 128, 128, 8
    $region5: #{tpu_custom_call.1} parent=1 // pred_fallthru
      _
    // Predicated region
    $region6: #{tpu_custom_call.1} parent=1 // pred_check
      _
    $region7: #{tpu_custom_call.1} parent=1 // pred_check_branch
      %24 = sbr.rel (0) target = $region9
    $region8: #{tpu_custom_call.1} parent=1 // pred_region
      %s26 = ssub.s32 1280, 1280
      %27 = vsyncadd [#allocation6], %s26
      %s28 = sshll.u32 [#allocation5], 4
      %s29 = int_to_ptr.vmem [resolvable:$true] %s28
      %34 = dma.hbm_to_vmem [thread:$0]  %s1, 1280, %s29, [#allocation6], 128, 128, 8
    $region9: #{tpu_custom_call.1} parent=1 // pred_fallthru
      _
    // Predicated region
    $region10: #{tpu_custom_call.1} parent=1 // pred_check
      _
    $region11: #{tpu_custom_call.1} parent=1 // pred_check_branch
      %36 = sbr.rel (0) target = $region13
    $region12: #{tpu_custom_call.1} parent=1 // pred_region
      %s38 = ssub.s32 384, 384
      %39 = vsyncadd [#allocation6], %s38
      %s40 = sshll.u32 [#allocation7], 4
      %s41 = int_to_ptr.vmem [resolvable:$true] %s40
      %46 = dma.hbm_to_vmem [thread:$0]  %s2, 384, %s41, [#allocation6], 128, 128, 8
    $region13: #{tpu_custom_call.1} parent=1 // pred_fallthru
      _
    // Predicated region
    $region14: #{tpu_custom_call.1} parent=1 // pred_check
      _
    $region15: #{tpu_custom_call.1} parent=1 // pred_check_branch
      %48 = sbr.rel (0) target = $region17
    $region16: #{tpu_custom_call.1} parent=1 // pred_region
      %49 = dma.done [#allocation3], 896
    $region17: #{tpu_custom_call.1} parent=1 // pred_fallthru
      _
    // Predicated region
    $region18: #{tpu_custom_call.1} parent=1 // pred_check
      _
    $region19: #{tpu_custom_call.1} parent=1 // pred_check_branch
      %51 = sbr.rel (0) target = $region21
    $region20: #{tpu_custom_call.1} parent=1 // pred_region
      %52 = dma.done [#allocation6], 1280
    $region21: #{tpu_custom_call.1} parent=1 // pred_fallthru
      _
    // Predicated region
    $region22: #{tpu_custom_call.1} parent=1 // pred_check
      _
    $region23: #{tpu_custom_call.1} parent=1 // pred_check_branch
      %54 = sbr.rel (0) target = $region25
    $region24: #{tpu_custom_call.1} parent=1 // pred_region
      %55 = dma.done [#allocation6], 384
    $region25: #{tpu_custom_call.1} parent=1 // pred_fallthru
      _
    %v56 = vld [vmem:[#allocation2] sm:$0xff]
    %v57 = vld [vmem:[#allocation2 + $0x8] sm:$0xff]
    %v58 = vld [vmem:[#allocation2 + $0x10] sm:$0x7]
    %v59 = vld [vmem:[#allocation2 + $0x18] sm:$0xff]
    %v60 = vld [vmem:[#allocation2 + $0x20] sm:$0xff]
    %v61 = vld [vmem:[#allocation2 + $0x28] sm:$0xff]
    %v62 = vld [vmem:[#allocation2 + $0x30] sm:$0xff]
    %v63 = vld [vmem:[#allocation5] sm:$0xff]
    %v64 = vld [vmem:[#allocation5 + $0x8] sm:$0x1]
    %v65 = vld [vmem:[#allocation5 + $0x10] sm:$0xff]
    %v66 = vld [vmem:[#allocation5 + $0x18] sm:$0xff]
    %v67 = vld [vmem:[#allocation5 + $0x20] sm:$0x1]
    %v68 = vld [vmem:[#allocation5 + $0x28] sm:$0xff]
    %v69 = vld [vmem:[#allocation5 + $0x30] sm:$0x1]
    %v70 = vld [vmem:[#allocation5 + $0x38] sm:$0xff]
    %v71 = vld [vmem:[#allocation5 + $0x40] sm:$0xff]
    %v72 = vld [vmem:[#allocation5 + $0x48] sm:$0x1]
    %v73 = vld [vmem:[#allocation7] sm:$0xff]
    %v74 = vld [vmem:[#allocation7 + $0x8] sm:$0xff]
    %v75 = vld [vmem:[#allocation7 + $0x10] sm:$0xff]
    %vm76 = vcmask 130048
    %v78 = vsel %vm76, %v56, 0
    %v81 = vsel %vm76, %v57, 0
    %83 = vmatprep.subr.mxu0 0.0
    %84 = vmatpush1.msra.mxu0 0.0
    %85 = vmatprep.subr.mxu0 0.0
    %86 = vmatpush1.msra.mxu0 0.0
    %87 = vmatprep.subr.mxu0 0.0
    %88 = vmatpush1.msra.mxu0 0.0
    %89 = vmatprep.subr.mxu0 0.0
    %90 = vmatpush1.msra.mxu0 0.0
    %91 = vmatprep.subr.mxu0 0.0
    %92 = vmatpush1.msra.mxu0 0.0
    %93 = vmatprep.subr.mxu0 0.0
    %94 = vmatpush1.msra.mxu0 0.0
    %95 = vmatprep.subr.mxu0 0.0
    %96 = vmatpush1.msra.mxu0 0.0
    %97 = vmatprep.subr.mxu0 0.0
    %98 = vmatpush1.msra.mxu0 0.0
    %99 = vmatprep.subr.mxu0 0.0
    %100 = vmatpush1.msra.mxu0 0.0
    %101 = vmatprep.subr.mxu0 0.0
    %102 = vmatpush1.msra.mxu0 0.0
    %103 = vmatprep.subr.mxu0 0.0
    %104 = vmatpush1.msra.mxu0 0.0
    %105 = vmatprep.subr.mxu0 0.0
    %106 = vmatpush1.msra.mxu0 0.0
    %107 = vmatprep.subr.mxu0 0.0
    %108 = vmatpush1.msra.mxu0 0.0
    %109 = vmatprep.subr.mxu0 0.0
    %110 = vmatpush1.msra.mxu0 0.0
    %111 = vmatprep.subr.mxu0 0.0
    %112 = vmatpush1.msra.mxu0 %v74
    %113 = vmatprep.subr.mxu0 0.0
    %114 = vmatpush1.msra.mxu0 %v73
    %115 = vmatprep.subr.mxu0 0.0
    %116 = vmatpush2.msra.mxu0 0.0
    %117 = vmatprep.subr.mxu0 0.0
    %118 = vmatpush2.msra.mxu0 0.0
    %119 = vmatprep.subr.mxu0 0.0
    %120 = vmatpush2.msra.mxu0 0.0
    %121 = vmatprep.subr.mxu0 0.0
    %122 = vmatpush2.msra.mxu0 0.0
    %123 = vmatprep.subr.mxu0 0.0
    %124 = vmatpush2.msra.mxu0 0.0
    %125 = vmatprep.subr.mxu0 0.0
    %126 = vmatpush2.msra.mxu0 0.0
    %127 = vmatprep.subr.mxu0 0.0
    %128 = vmatpush2.msra.mxu0 0.0
    %129 = vmatprep.subr.mxu0 0.0
    %130 = vmatpush2.msra.mxu0 0.0
    %131 = vmatprep.subr.mxu0 0.0
    %132 = vmatpush2.msra.mxu0 0.0
    %133 = vmatprep.subr.mxu0 0.0
    %134 = vmatpush2.msra.mxu0 0.0
    %135 = vmatprep.subr.mxu0 0.0
    %136 = vmatpush2.msra.mxu0 0.0
    %137 = vmatprep.subr.mxu0 0.0
    %138 = vmatpush2.msra.mxu0 0.0
    %139 = vmatprep.subr.mxu0 0.0
    %140 = vmatpush2.msra.mxu0 0.0
    %141 = vmatprep.subr.mxu0 0.0
    %142 = vmatpush2.msra.mxu0 0.0
    %143 = vmatprep.subr.mxu0 0.0
    %144 = vmatpush2.msra.mxu0 0.0
    %145 = vmatprep.subr.mxu0 0.0
    %146 = vmatpush2.msra.mxu0 0.0
    %147 = vmatprep.mubr.f32.mxu0 0.0
    %148 = vmatmul.mubr.f32.gmra.mxu0 %v78
    %v149 = vpop.f32.mrf.mxu0
    %v150 = vadd.f32 0.0, %v149
    %v151 = vpop.f32.mrf.mxu0
    %152 = vmatprep.mubr.f32.mxu0 0.0
    %153 = vmatmul.mubr.f32.gmra.mxu0 %v81
    %v154 = vpop.f32.mrf.mxu0
    %v155 = vadd.f32 0.0, %v154
    %v156 = vpop.f32.mrf.mxu0
    %157 = vdwg.mxu0
    %v158 = vlaneseq
    %v159 = vshrl.u32 %v158, 7
    %v160 = vsub.s32 0, %v159
    %v161 = vrot.slane %v64, %v160
    %vm162 = vcmask 64512
    %v164 = vsel %vm162, %v150, 0
    %v167 = vsel %vm162, %v155, 0
    %169 = vmatprep.subr.mxu0 0.0
    %170 = vmatpush1.msra.mxu0 0.0
    %171 = vmatprep.subr.mxu0 0.0
    %172 = vmatpush1.msra.mxu0 0.0
    %173 = vmatprep.subr.mxu0 0.0
    %174 = vmatpush1.msra.mxu0 0.0
    %175 = vmatprep.subr.mxu0 0.0
    %176 = vmatpush1.msra.mxu0 0.0
    %177 = vmatprep.subr.mxu0 0.0
    %178 = vmatpush1.msra.mxu0 0.0
    %179 = vmatprep.subr.mxu0 0.0
    %180 = vmatpush1.msra.mxu0 0.0
    %181 = vmatprep.subr.mxu0 0.0
    %182 = vmatpush1.msra.mxu0 0.0
    %183 = vmatprep.subr.mxu0 0.0
    %184 = vmatpush1.msra.mxu0 0.0
    %185 = vmatprep.subr.mxu0 0.0
    %186 = vmatpush1.msra.mxu0 0.0
    %187 = vmatprep.subr.mxu0 0.0
    %188 = vmatpush1.msra.mxu0 0.0
    %189 = vmatprep.subr.mxu0 0.0
    %190 = vmatpush1.msra.mxu0 0.0
    %191 = vmatprep.subr.mxu0 0.0
    %192 = vmatpush1.msra.mxu0 0.0
    %193 = vmatprep.subr.mxu0 0.0
    %194 = vmatpush1.msra.mxu0 0.0
    %195 = vmatprep.subr.mxu0 0.0
    %196 = vmatpush1.msra.mxu0 0.0
    %197 = vmatprep.subr.mxu0 0.0
    %198 = vmatpush1.msra.mxu0 0.0
    %199 = vmatprep.subr.mxu0 0.0
    %200 = vmatpush1.msra.mxu0 %v63
    %201 = vmatprep.subr.mxu0 0.0
    %202 = vmatpush2.msra.mxu0 0.0
    %203 = vmatprep.subr.mxu0 0.0
    %204 = vmatpush2.msra.mxu0 0.0
    %205 = vmatprep.subr.mxu0 0.0
    %206 = vmatpush2.msra.mxu0 0.0
    %207 = vmatprep.subr.mxu0 0.0
    %208 = vmatpush2.msra.mxu0 0.0
    %209 = vmatprep.subr.mxu0 0.0
    %210 = vmatpush2.msra.mxu0 0.0
    %211 = vmatprep.subr.mxu0 0.0
    %212 = vmatpush2.msra.mxu0 0.0
    %213 = vmatprep.subr.mxu0 0.0
    %214 = vmatpush2.msra.mxu0 0.0
    %215 = vmatprep.subr.mxu0 0.0
    %216 = vmatpush2.msra.mxu0 0.0
    %217 = vmatprep.subr.mxu0 0.0
    %218 = vmatpush2.msra.mxu0 0.0
    %219 = vmatprep.subr.mxu0 0.0
    %220 = vmatpush2.msra.mxu0 0.0
    %221 = vmatprep.subr.mxu0 0.0
    %222 = vmatpush2.msra.mxu0 0.0
    %223 = vmatprep.subr.mxu0 0.0
    %224 = vmatpush2.msra.mxu0 0.0
    %225 = vmatprep.subr.mxu0 0.0
    %226 = vmatpush2.msra.mxu0 0.0
    %227 = vmatprep.subr.mxu0 0.0
    %228 = vmatpush2.msra.mxu0 0.0
    %229 = vmatprep.subr.mxu0 0.0
    %230 = vmatpush2.msra.mxu0 0.0
    %231 = vmatprep.subr.mxu0 0.0
    %232 = vmatpush2.msra.mxu0 0.0
    %233 = vmatprep.mubr.f32.mxu0 0.0
    %234 = vmatmul.mubr.f32.gmra.mxu0 %v164
    %v235 = vpop.f32.mrf.mxu0
    %v236 = vadd.f32 %v161, %v235
    %v237 = vpop.f32.mrf.mxu0
    %238 = vmatprep.mubr.f32.mxu0 0.0
    %239 = vmatmul.mubr.f32.gmra.mxu0 %v167
    %v240 = vpop.f32.mrf.mxu0
    %v241 = vadd.f32 %v161, %v240
    %v242 = vpop.f32.mrf.mxu0
    %243 = vdwg.mxu0
    %v244 = vtanh.pop %v236
    %v245 = vtanh.pop %v241
    %v247 = vsel %vm76, %v58, 0
    %249 = vmatprep.subr.mxu0 0.0
    %250 = vmatpush1.msra.mxu0 0.0
    %251 = vmatprep.subr.mxu0 0.0
    %252 = vmatpush1.msra.mxu0 0.0
    %253 = vmatprep.subr.mxu0 0.0
    %254 = vmatpush1.msra.mxu0 0.0
    %255 = vmatprep.subr.mxu0 0.0
    %256 = vmatpush1.msra.mxu0 0.0
    %257 = vmatprep.subr.mxu0 0.0
    %258 = vmatpush1.msra.mxu0 0.0
    %259 = vmatprep.subr.mxu0 0.0
    %260 = vmatpush1.msra.mxu0 0.0
    %261 = vmatprep.subr.mxu0 0.0
    %262 = vmatpush1.msra.mxu0 0.0
    %263 = vmatprep.subr.mxu0 0.0
    %264 = vmatpush1.msra.mxu0 0.0
    %265 = vmatprep.subr.mxu0 0.0
    %266 = vmatpush1.msra.mxu0 0.0
    %267 = vmatprep.subr.mxu0 0.0
    %268 = vmatpush1.msra.mxu0 0.0
    %269 = vmatprep.subr.mxu0 0.0
    %270 = vmatpush1.msra.mxu0 0.0
    %271 = vmatprep.subr.mxu0 0.0
    %272 = vmatpush1.msra.mxu0 0.0
    %273 = vmatprep.subr.mxu0 0.0
    %274 = vmatpush1.msra.mxu0 0.0
    %275 = vmatprep.subr.mxu0 0.0
    %276 = vmatpush1.msra.mxu0 0.0
    %277 = vmatprep.subr.mxu0 0.0
    %278 = vmatpush1.msra.mxu0 %v245
    %279 = vmatprep.subr.mxu0 0.0
    %280 = vmatpush1.msra.mxu0 %v244
    %281 = vmatprep.subr.mxu0 0.0
    %282 = vmatpush2.msra.mxu0 0.0
    %283 = vmatprep.subr.mxu0 0.0
    %284 = vmatpush2.msra.mxu0 0.0
    %285 = vmatprep.subr.mxu0 0.0
    %286 = vmatpush2.msra.mxu0 0.0
    %287 = vmatprep.subr.mxu0 0.0
    %288 = vmatpush2.msra.mxu0 0.0
    %289 = vmatprep.subr.mxu0 0.0
    %290 = vmatpush2.msra.mxu0 0.0
    %291 = vmatprep.subr.mxu0 0.0
    %292 = vmatpush2.msra.mxu0 0.0
    %293 = vmatprep.subr.mxu0 0.0
    %294 = vmatpush2.msra.mxu0 0.0
    %295 = vmatprep.subr.mxu0 0.0
    %296 = vmatpush2.msra.mxu0 0.0
    %297 = vmatprep.subr.mxu0 0.0
    %298 = vmatpush2.msra.mxu0 0.0
    %299 = vmatprep.subr.mxu0 0.0
    %300 = vmatpush2.msra.mxu0 0.0
    %301 = vmatprep.subr.mxu0 0.0
    %302 = vmatpush2.msra.mxu0 0.0
    %303 = vmatprep.subr.mxu0 0.0
    %304 = vmatpush2.msra.mxu0 0.0
    %305 = vmatprep.subr.mxu0 0.0
    %306 = vmatpush2.msra.mxu0 0.0
    %307 = vmatprep.subr.mxu0 0.0
    %308 = vmatpush2.msra.mxu0 0.0
    %309 = vmatprep.subr.mxu0 0.0
    %310 = vmatpush2.msra.mxu0 0.0
    %311 = vmatprep.subr.mxu0 0.0
    %312 = vmatpush2.msra.mxu0 0.0
    %313 = vmatprep.mubr.f32.mxu0 0.0
    %314 = vmatmul.mubr.f32.gmra.mxu0 %v247
    %v315 = vpop.f32.mrf.mxu0
    %v316 = vadd.f32 0.0, %v315
    %v317 = vpop.f32.mrf.mxu0
    %318 = vdwg.mxu0
    %v319 = vlaneseq
    %v320 = vshrl.u32 %v319, 7
    %v321 = vsub.s32 0, %v320
    %v322 = vrot.slane %v67, %v321
    %v324 = vsel %vm76, %v316, 0
    %326 = vmatprep.subr.mxu0 0.0
    %327 = vmatpush1.msra.mxu0 0.0
    %328 = vmatprep.subr.mxu0 0.0
    %329 = vmatpush1.msra.mxu0 0.0
    %330 = vmatprep.subr.mxu0 0.0
    %331 = vmatpush1.msra.mxu0 0.0
    %332 = vmatprep.subr.mxu0 0.0
    %333 = vmatpush1.msra.mxu0 0.0
    %334 = vmatprep.subr.mxu0 0.0
    %335 = vmatpush1.msra.mxu0 0.0
    %336 = vmatprep.subr.mxu0 0.0
    %337 = vmatpush1.msra.mxu0 0.0
    %338 = vmatprep.subr.mxu0 0.0
    %339 = vmatpush1.msra.mxu0 0.0
    %340 = vmatprep.subr.mxu0 0.0
    %341 = vmatpush1.msra.mxu0 0.0
    %342 = vmatprep.subr.mxu0 0.0
    %343 = vmatpush1.msra.mxu0 0.0
    %344 = vmatprep.subr.mxu0 0.0
    %345 = vmatpush1.msra.mxu0 0.0
    %346 = vmatprep.subr.mxu0 0.0
    %347 = vmatpush1.msra.mxu0 0.0
    %348 = vmatprep.subr.mxu0 0.0
    %349 = vmatpush1.msra.mxu0 0.0
    %350 = vmatprep.subr.mxu0 0.0
    %351 = vmatpush1.msra.mxu0 0.0
    %352 = vmatprep.subr.mxu0 0.0
    %353 = vmatpush1.msra.mxu0 0.0
    %354 = vmatprep.subr.mxu0 0.0
    %355 = vmatpush1.msra.mxu0 %v66
    %356 = vmatprep.subr.mxu0 0.0
    %357 = vmatpush1.msra.mxu0 %v65
    %358 = vmatprep.subr.mxu0 0.0
    %359 = vmatpush2.msra.mxu0 0.0
    %360 = vmatprep.subr.mxu0 0.0
    %361 = vmatpush2.msra.mxu0 0.0
    %362 = vmatprep.subr.mxu0 0.0
    %363 = vmatpush2.msra.mxu0 0.0
    %364 = vmatprep.subr.mxu0 0.0
    %365 = vmatpush2.msra.mxu0 0.0
    %366 = vmatprep.subr.mxu0 0.0
    %367 = vmatpush2.msra.mxu0 0.0
    %368 = vmatprep.subr.mxu0 0.0
    %369 = vmatpush2.msra.mxu0 0.0
    %370 = vmatprep.subr.mxu0 0.0
    %371 = vmatpush2.msra.mxu0 0.0
    %372 = vmatprep.subr.mxu0 0.0
    %373 = vmatpush2.msra.mxu0 0.0
    %374 = vmatprep.subr.mxu0 0.0
    %375 = vmatpush2.msra.mxu0 0.0
    %376 = vmatprep.subr.mxu0 0.0
    %377 = vmatpush2.msra.mxu0 0.0
    %378 = vmatprep.subr.mxu0 0.0
    %379 = vmatpush2.msra.mxu0 0.0
    %380 = vmatprep.subr.mxu0 0.0
    %381 = vmatpush2.msra.mxu0 0.0
    %382 = vmatprep.subr.mxu0 0.0
    %383 = vmatpush2.msra.mxu0 0.0
    %384 = vmatprep.subr.mxu0 0.0
    %385 = vmatpush2.msra.mxu0 0.0
    %386 = vmatprep.subr.mxu0 0.0
    %387 = vmatpush2.msra.mxu0 0.0
    %388 = vmatprep.subr.mxu0 0.0
    %389 = vmatpush2.msra.mxu0 0.0
    %390 = vmatprep.mubr.f32.mxu0 0.0
    %391 = vmatmul.mubr.f32.gmra.mxu0 %v324
    %v392 = vpop.f32.mrf.mxu0
    %v393 = vadd.f32 %v322, %v392
    %v394 = vpop.f32.mrf.mxu0
    %395 = vdwg.mxu0
    %v396 = vtanh.pop %v393
    %v398 = vsel %vm162, %v59, 0
    %v401 = vsel %vm162, %v60, 0
    %v404 = vsel %vm162, %v61, 0
    %406 = vmatprep.subr.mxu0 0.0
    %407 = vmatpush1.msra.mxu0 0.0
    %408 = vmatprep.subr.mxu0 0.0
    %409 = vmatpush1.msra.mxu0 0.0
    %410 = vmatprep.subr.mxu0 0.0
    %411 = vmatpush1.msra.mxu0 0.0
    %412 = vmatprep.subr.mxu0 0.0
    %413 = vmatpush1.msra.mxu0 0.0
    %414 = vmatprep.subr.mxu0 0.0
    %415 = vmatpush1.msra.mxu0 0.0
    %416 = vmatprep.subr.mxu0 0.0
    %417 = vmatpush1.msra.mxu0 0.0
    %418 = vmatprep.subr.mxu0 0.0
    %419 = vmatpush1.msra.mxu0 0.0
    %420 = vmatprep.subr.mxu0 0.0
    %421 = vmatpush1.msra.mxu0 0.0
    %422 = vmatprep.subr.mxu0 0.0
    %423 = vmatpush1.msra.mxu0 0.0
    %424 = vmatprep.subr.mxu0 0.0
    %425 = vmatpush1.msra.mxu0 0.0
    %426 = vmatprep.subr.mxu0 0.0
    %427 = vmatpush1.msra.mxu0 0.0
    %428 = vmatprep.subr.mxu0 0.0
    %429 = vmatpush1.msra.mxu0 0.0
    %430 = vmatprep.subr.mxu0 0.0
    %431 = vmatpush1.msra.mxu0 0.0
    %432 = vmatprep.subr.mxu0 0.0
    %433 = vmatpush1.msra.mxu0 0.0
    %434 = vmatprep.subr.mxu0 0.0
    %435 = vmatpush1.msra.mxu0 0.0
    %436 = vmatprep.subr.mxu0 0.0
    %437 = vmatpush1.msra.mxu0 %v75
    %438 = vmatprep.subr.mxu0 0.0
    %439 = vmatpush2.msra.mxu0 0.0
    %440 = vmatprep.subr.mxu0 0.0
    %441 = vmatpush2.msra.mxu0 0.0
    %442 = vmatprep.subr.mxu0 0.0
    %443 = vmatpush2.msra.mxu0 0.0
    %444 = vmatprep.subr.mxu0 0.0
    %445 = vmatpush2.msra.mxu0 0.0
    %446 = vmatprep.subr.mxu0 0.0
    %447 = vmatpush2.msra.mxu0 0.0
    %448 = vmatprep.subr.mxu0 0.0
    %449 = vmatpush2.msra.mxu0 0.0
    %450 = vmatprep.subr.mxu0 0.0
    %451 = vmatpush2.msra.mxu0 0.0
    %452 = vmatprep.subr.mxu0 0.0
    %453 = vmatpush2.msra.mxu0 0.0
    %454 = vmatprep.subr.mxu0 0.0
    %455 = vmatpush2.msra.mxu0 0.0
    %456 = vmatprep.subr.mxu0 0.0
    %457 = vmatpush2.msra.mxu0 0.0
    %458 = vmatprep.subr.mxu0 0.0
    %459 = vmatpush2.msra.mxu0 0.0
    %460 = vmatprep.subr.mxu0 0.0
    %461 = vmatpush2.msra.mxu0 0.0
    %462 = vmatprep.subr.mxu0 0.0
    %463 = vmatpush2.msra.mxu0 0.0
    %464 = vmatprep.subr.mxu0 0.0
    %465 = vmatpush2.msra.mxu0 0.0
    %466 = vmatprep.subr.mxu0 0.0
    %467 = vmatpush2.msra.mxu0 0.0
    %468 = vmatprep.subr.mxu0 0.0
    %469 = vmatpush2.msra.mxu0 0.0
    %470 = vmatprep.mubr.f32.mxu0 0.0
    %471 = vmatmul.mubr.f32.gmra.mxu0 %v398
    %v472 = vpop.f32.mrf.mxu0
    %v473 = vadd.f32 0.0, %v472
    %v474 = vpop.f32.mrf.mxu0
    %475 = vmatprep.mubr.f32.mxu0 0.0
    %476 = vmatmul.mubr.f32.gmra.mxu0 %v401
    %v477 = vpop.f32.mrf.mxu0
    %v478 = vadd.f32 0.0, %v477
    %v479 = vpop.f32.mrf.mxu0
    %480 = vmatprep.mubr.f32.mxu0 0.0
    %481 = vmatmul.mubr.f32.gmra.mxu0 %v404
    %v482 = vpop.f32.mrf.mxu0
    %v483 = vadd.f32 0.0, %v482
    %v484 = vpop.f32.mrf.mxu0
    %485 = vdwg.mxu0
    %v486 = vlaneseq
    %v487 = vshrl.u32 %v486, 7
    %v488 = vsub.s32 0, %v487
    %v489 = vrot.slane %v396, %v488
    %v490 = vmul.f32 %v473, %v489
    %v491 = vadd.f32 %v490, 0.0
    %v492 = vlaneseq
    %v493 = vshrl.u32 %v492, 7
    %v494 = vsub.s32 1, %v493
    %v495 = vrot.slane %v396, %v494
    %v496 = vmul.f32 %v478, %v495
    %v497 = vadd.f32 %v491, %v496
    %v498 = vlaneseq
    %v499 = vshrl.u32 %v498, 7
    %v500 = vsub.s32 2, %v499
    %v501 = vrot.slane %v396, %v500
    %v502 = vmul.f32 %v483, %v501
    %v503 = vadd.f32 %v497, %v502
    %v504 = vlaneseq
    %v505 = vshrl.u32 %v504, 7
    %v506 = vsub.s32 0, %v505
    %v507 = vrot.slane %v69, %v506
    %v509 = vsel %vm162, %v503, 0
    %511 = vmatprep.subr.mxu0 0.0
    %512 = vmatpush1.msra.mxu0 0.0
    %513 = vmatprep.subr.mxu0 0.0
    %514 = vmatpush1.msra.mxu0 0.0
    %515 = vmatprep.subr.mxu0 0.0
    %516 = vmatpush1.msra.mxu0 0.0
    %517 = vmatprep.subr.mxu0 0.0
    %518 = vmatpush1.msra.mxu0 0.0
    %519 = vmatprep.subr.mxu0 0.0
    %520 = vmatpush1.msra.mxu0 0.0
    %521 = vmatprep.subr.mxu0 0.0
    %522 = vmatpush1.msra.mxu0 0.0
    %523 = vmatprep.subr.mxu0 0.0
    %524 = vmatpush1.msra.mxu0 0.0
    %525 = vmatprep.subr.mxu0 0.0
    %526 = vmatpush1.msra.mxu0 0.0
    %527 = vmatprep.subr.mxu0 0.0
    %528 = vmatpush1.msra.mxu0 0.0
    %529 = vmatprep.subr.mxu0 0.0
    %530 = vmatpush1.msra.mxu0 0.0
    %531 = vmatprep.subr.mxu0 0.0
    %532 = vmatpush1.msra.mxu0 0.0
    %533 = vmatprep.subr.mxu0 0.0
    %534 = vmatpush1.msra.mxu0 0.0
    %535 = vmatprep.subr.mxu0 0.0
    %536 = vmatpush1.msra.mxu0 0.0
    %537 = vmatprep.subr.mxu0 0.0
    %538 = vmatpush1.msra.mxu0 0.0
    %539 = vmatprep.subr.mxu0 0.0
    %540 = vmatpush1.msra.mxu0 0.0
    %541 = vmatprep.subr.mxu0 0.0
    %542 = vmatpush1.msra.mxu0 %v68
    %543 = vmatprep.subr.mxu0 0.0
    %544 = vmatpush2.msra.mxu0 0.0
    %545 = vmatprep.subr.mxu0 0.0
    %546 = vmatpush2.msra.mxu0 0.0
    %547 = vmatprep.subr.mxu0 0.0
    %548 = vmatpush2.msra.mxu0 0.0
    %549 = vmatprep.subr.mxu0 0.0
    %550 = vmatpush2.msra.mxu0 0.0
    %551 = vmatprep.subr.mxu0 0.0
    %552 = vmatpush2.msra.mxu0 0.0
    %553 = vmatprep.subr.mxu0 0.0
    %554 = vmatpush2.msra.mxu0 0.0
    %555 = vmatprep.subr.mxu0 0.0
    %556 = vmatpush2.msra.mxu0 0.0
    %557 = vmatprep.subr.mxu0 0.0
    %558 = vmatpush2.msra.mxu0 0.0
    %559 = vmatprep.subr.mxu0 0.0
    %560 = vmatpush2.msra.mxu0 0.0
    %561 = vmatprep.subr.mxu0 0.0
    %562 = vmatpush2.msra.mxu0 0.0
    %563 = vmatprep.subr.mxu0 0.0
    %564 = vmatpush2.msra.mxu0 0.0
    %565 = vmatprep.subr.mxu0 0.0
    %566 = vmatpush2.msra.mxu0 0.0
    %567 = vmatprep.subr.mxu0 0.0
    %568 = vmatpush2.msra.mxu0 0.0
    %569 = vmatprep.subr.mxu0 0.0
    %570 = vmatpush2.msra.mxu0 0.0
    %571 = vmatprep.subr.mxu0 0.0
    %572 = vmatpush2.msra.mxu0 0.0
    %573 = vmatprep.subr.mxu0 0.0
    %574 = vmatpush2.msra.mxu0 0.0
    %575 = vmatprep.mubr.f32.mxu0 0.0
    %576 = vmatmul.mubr.f32.gmra.mxu0 %v509
    %v577 = vpop.f32.mrf.mxu0
    %v578 = vadd.f32 %v507, %v577
    %v579 = vpop.f32.mrf.mxu0
    %580 = vdwg.mxu0
    %v581 = vtanh.pop %v578
    %v583 = vsel %vm162, %v62, 0
    %585 = vmatprep.subr.mxu0 0.0
    %586 = vmatpush1.msra.mxu0 0.0
    %587 = vmatprep.subr.mxu0 0.0
    %588 = vmatpush1.msra.mxu0 0.0
    %589 = vmatprep.subr.mxu0 0.0
    %590 = vmatpush1.msra.mxu0 0.0
    %591 = vmatprep.subr.mxu0 0.0
    %592 = vmatpush1.msra.mxu0 0.0
    %593 = vmatprep.subr.mxu0 0.0
    %594 = vmatpush1.msra.mxu0 0.0
    %595 = vmatprep.subr.mxu0 0.0
    %596 = vmatpush1.msra.mxu0 0.0
    %597 = vmatprep.subr.mxu0 0.0
    %598 = vmatpush1.msra.mxu0 0.0
    %599 = vmatprep.subr.mxu0 0.0
    %600 = vmatpush1.msra.mxu0 0.0
    %601 = vmatprep.subr.mxu0 0.0
    %602 = vmatpush1.msra.mxu0 0.0
    %603 = vmatprep.subr.mxu0 0.0
    %604 = vmatpush1.msra.mxu0 0.0
    %605 = vmatprep.subr.mxu0 0.0
    %606 = vmatpush1.msra.mxu0 0.0
    %607 = vmatprep.subr.mxu0 0.0
    %608 = vmatpush1.msra.mxu0 0.0
    %609 = vmatprep.subr.mxu0 0.0
    %610 = vmatpush1.msra.mxu0 0.0
    %611 = vmatprep.subr.mxu0 0.0
    %612 = vmatpush1.msra.mxu0 0.0
    %613 = vmatprep.subr.mxu0 0.0
    %614 = vmatpush1.msra.mxu0 0.0
    %615 = vmatprep.subr.mxu0 0.0
    %616 = vmatpush1.msra.mxu0 %v581
    %617 = vmatprep.subr.mxu0 0.0
    %618 = vmatpush2.msra.mxu0 0.0
    %619 = vmatprep.subr.mxu0 0.0
    %620 = vmatpush2.msra.mxu0 0.0
    %621 = vmatprep.subr.mxu0 0.0
    %622 = vmatpush2.msra.mxu0 0.0
    %623 = vmatprep.subr.mxu0 0.0
    %624 = vmatpush2.msra.mxu0 0.0
    %625 = vmatprep.subr.mxu0 0.0
    %626 = vmatpush2.msra.mxu0 0.0
    %627 = vmatprep.subr.mxu0 0.0
    %628 = vmatpush2.msra.mxu0 0.0
    %629 = vmatprep.subr.mxu0 0.0
    %630 = vmatpush2.msra.mxu0 0.0
    %631 = vmatprep.subr.mxu0 0.0
    %632 = vmatpush2.msra.mxu0 0.0
    %633 = vmatprep.subr.mxu0 0.0
    %634 = vmatpush2.msra.mxu0 0.0
    %635 = vmatprep.subr.mxu0 0.0
    %636 = vmatpush2.msra.mxu0 0.0
    %637 = vmatprep.subr.mxu0 0.0
    %638 = vmatpush2.msra.mxu0 0.0
    %639 = vmatprep.subr.mxu0 0.0
    %640 = vmatpush2.msra.mxu0 0.0
    %641 = vmatprep.subr.mxu0 0.0
    %642 = vmatpush2.msra.mxu0 0.0
    %643 = vmatprep.subr.mxu0 0.0
    %644 = vmatpush2.msra.mxu0 0.0
    %645 = vmatprep.subr.mxu0 0.0
    %646 = vmatpush2.msra.mxu0 0.0
    %647 = vmatprep.subr.mxu0 0.0
    %648 = vmatpush2.msra.mxu0 0.0
    %649 = vmatprep.mubr.f32.mxu0 0.0
    %650 = vmatmul.mubr.f32.gmra.mxu0 %v583
    %v651 = vpop.f32.mrf.mxu0
    %v652 = vadd.f32 0.0, %v651
    %v653 = vpop.f32.mrf.mxu0
    %654 = vdwg.mxu0
    %v655 = vlaneseq
    %v656 = vshrl.u32 %v655, 7
    %v657 = vsub.s32 0, %v656
    %v658 = vrot.slane %v72, %v657
    %v660 = vsel %vm76, %v652, 0
    %662 = vmatprep.subr.mxu0 0.0
    %663 = vmatpush1.msra.mxu0 0.0
    %664 = vmatprep.subr.mxu0 0.0
    %665 = vmatpush1.msra.mxu0 0.0
    %666 = vmatprep.subr.mxu0 0.0
    %667 = vmatpush1.msra.mxu0 0.0
    %668 = vmatprep.subr.mxu0 0.0
    %669 = vmatpush1.msra.mxu0 0.0
    %670 = vmatprep.subr.mxu0 0.0
    %671 = vmatpush1.msra.mxu0 0.0
    %672 = vmatprep.subr.mxu0 0.0
    %673 = vmatpush1.msra.mxu0 0.0
    %674 = vmatprep.subr.mxu0 0.0
    %675 = vmatpush1.msra.mxu0 0.0
    %676 = vmatprep.subr.mxu0 0.0
    %677 = vmatpush1.msra.mxu0 0.0
    %678 = vmatprep.subr.mxu0 0.0
    %679 = vmatpush1.msra.mxu0 0.0
    %680 = vmatprep.subr.mxu0 0.0
    %681 = vmatpush1.msra.mxu0 0.0
    %682 = vmatprep.subr.mxu0 0.0
    %683 = vmatpush1.msra.mxu0 0.0
    %684 = vmatprep.subr.mxu0 0.0
    %685 = vmatpush1.msra.mxu0 0.0
    %686 = vmatprep.subr.mxu0 0.0
    %687 = vmatpush1.msra.mxu0 0.0
    %688 = vmatprep.subr.mxu0 0.0
    %689 = vmatpush1.msra.mxu0 0.0
    %690 = vmatprep.subr.mxu0 0.0
    %691 = vmatpush1.msra.mxu0 %v71
    %692 = vmatprep.subr.mxu0 0.0
    %693 = vmatpush1.msra.mxu0 %v70
    %694 = vmatprep.subr.mxu0 0.0
    %695 = vmatpush2.msra.mxu0 0.0
    %696 = vmatprep.subr.mxu0 0.0
    %697 = vmatpush2.msra.mxu0 0.0
    %698 = vmatprep.subr.mxu0 0.0
    %699 = vmatpush2.msra.mxu0 0.0
    %700 = vmatprep.subr.mxu0 0.0
    %701 = vmatpush2.msra.mxu0 0.0
    %702 = vmatprep.subr.mxu0 0.0
    %703 = vmatpush2.msra.mxu0 0.0
    %704 = vmatprep.subr.mxu0 0.0
    %705 = vmatpush2.msra.mxu0 0.0
    %706 = vmatprep.subr.mxu0 0.0
    %707 = vmatpush2.msra.mxu0 0.0
    %708 = vmatprep.subr.mxu0 0.0
    %709 = vmatpush2.msra.mxu0 0.0
    %710 = vmatprep.subr.mxu0 0.0
    %711 = vmatpush2.msra.mxu0 0.0
    %712 = vmatprep.subr.mxu0 0.0
    %713 = vmatpush2.msra.mxu0 0.0
    %714 = vmatprep.subr.mxu0 0.0
    %715 = vmatpush2.msra.mxu0 0.0
    %716 = vmatprep.subr.mxu0 0.0
    %717 = vmatpush2.msra.mxu0 0.0
    %718 = vmatprep.subr.mxu0 0.0
    %719 = vmatpush2.msra.mxu0 0.0
    %720 = vmatprep.subr.mxu0 0.0
    %721 = vmatpush2.msra.mxu0 0.0
    %722 = vmatprep.subr.mxu0 0.0
    %723 = vmatpush2.msra.mxu0 0.0
    %724 = vmatprep.subr.mxu0 0.0
    %725 = vmatpush2.msra.mxu0 0.0
    %726 = vmatprep.mubr.f32.mxu0 0.0
    %727 = vmatmul.mubr.f32.gmra.mxu0 %v660
    %v728 = vpop.f32.mrf.mxu0
    %v729 = vadd.f32 %v658, %v728
    %v730 = vpop.f32.mrf.mxu0
    %731 = vdwg.mxu0
    %v732 = vtanh.pop %v729
    %733 = vst [vmem:[#allocation8] sm:$0xff] %v732
    // Predicated region
    $region26: #{tpu_custom_call.1} parent=1 // pred_check
      _
    $region27: #{tpu_custom_call.1} parent=1 // pred_check_branch
      %735 = sbr.rel (0) target = $region29
    $region28: #{tpu_custom_call.1} parent=1 // pred_region
      %s737 = ssub.s32 128, 128
      %738 = vsyncadd [#allocation4], %s737
      %s740 = sshll.u32 [#allocation8], 4
      %s741 = int_to_ptr.vmem [resolvable:$true] %s740
      %743 = dma.vmem_to_hbm [thread:$0]  %s741, 128, %s3, [#allocation4]
    $region29: #{tpu_custom_call.1} parent=1 // pred_fallthru
      _
    // Predicated region
    $region30: #{tpu_custom_call.1} parent=1 // pred_check
      _
    $region31: #{tpu_custom_call.1} parent=1 // pred_check_branch
      %745 = sbr.rel (0) target = $region33
    $region32: #{tpu_custom_call.1} parent=1 // pred_region
      %746 = dma.done [#allocation4], 128
    $region33: #{tpu_custom_call.1} parent=1 // pred_fallthru
      _
    %747 = vsyncpa [#allocation3], 1
    %748 = vsyncpa [#allocation6], 1
    %749 = vsyncpa [#allocation4], 1

</llo_original>
